<compile_context>
chip_gen: v7x
topology: tpu7x:2x2x1
jax: 0.10.0
libtpu: 0.0.40
codegen_flags: <defaults>
</compile_context>

<pallas_src>
import math
import functools

import jax
import jax.numpy as jnp
from jax.experimental import pallas as pl
from jax.experimental.pallas import tpu as pltpu

_LANES = 128  # TPU lane width; everything is padded to lane-dense 128-wide slabs.


def _round_up(n, m):
    return ((n + m - 1) // m) * m


def _pad_block(a, rows, cols=_LANES):
    out = jnp.zeros((rows, cols), jnp.float32)
    return out.at[: a.shape[0], : a.shape[1]].set(a.astype(jnp.float32))


# --------------------------------------------------------------------------------------
# Encoder MLP on the K pseudo-inputs -> mixture component parameters (one fused kernel).
# --------------------------------------------------------------------------------------
def pack_params(params):
    """Pack pseudo-inputs + all MLP weights/biases into one (4*Kp + 3*128, 128) f32 slab.

    Layout (row offsets are static):
      [x (Kp rows)] [w1 (128)] [b1 (Kp, pre-broadcast)] [w2 (128)] [b2 (Kp)] [w3 (128)] [b3 (Kp)]
    Zero padding beyond the real (D, H, 2M) extents keeps the padded matmuls exact.
    """
    x = params["pseudo_x"]
    K, D = x.shape
    H = params["w1"].shape[1]
    two_m = params["w3"].shape[1]
    assert max(D, H, two_m) <= _LANES, "single-block kernel assumes dims <= 128"
    kp = _round_up(K, 8)

    def bias_block(b):
        return _pad_block(jnp.broadcast_to(b[None, :], (kp, b.shape[0])), kp)

    blocks = [
        _pad_block(x, kp),
        _pad_block(params["w1"], _LANES), bias_block(params["b1"]),
        _pad_block(params["w2"], _LANES), bias_block(params["b2"]),
        _pad_block(params["w3"], _LANES), bias_block(params["b3"]),
    ]
    return jnp.concatenate(blocks, axis=0)


def _make_encoder_kernel(kp):
    o_x = 0
    o_w1 = o_x + kp
    o_b1 = o_w1 + _LANES
    o_w2 = o_b1 + kp
    o_b2 = o_w2 + _LANES
    o_w3 = o_b2 + kp
    o_b3 = o_w3 + _LANES

    def kernel(p_ref, out_ref):
        # Single packed VMEM input: static row slices, no extra DMA descriptors.
        x = p_ref[o_x:o_x + kp, :]
        w1 = p_ref[o_w1:o_w1 + _LANES, :]
        b1 = p_ref[o_b1:o_b1 + kp, :]
        w2 = p_ref[o_w2:o_w2 + _LANES, :]
        b2 = p_ref[o_b2:o_b2 + kp, :]
        w3 = p_ref[o_w3:o_w3 + _LANES, :]
        b3 = p_ref[o_b3:o_b3 + kp, :]
        h1 = jnp.maximum(jnp.dot(x, w1, preferred_element_type=jnp.float32) + b1, 0.0)
        h2 = jnp.maximum(jnp.dot(h1, w2, preferred_element_type=jnp.float32) + b2, 0.0)
        # Combined head: cols [0:M) = mean, [M:2M) = log_std, [2M:128) = zero padding.
        out_ref[...] = jnp.dot(h2, w3, preferred_element_type=jnp.float32) + b3

    return kernel


def vamp_prior_forward(packed, K, M):
    """Returns (mix_logits, component means, component log_stds) of the VampPrior mixture."""
    kp = _round_up(K, 8)
    vmem = pl.BlockSpec(memory_space=pltpu.MemorySpace.VMEM)
    out = pl.pallas_call(
        _make_encoder_kernel(kp),
        out_shape=jax.ShapeDtypeStruct((kp, _LANES), jnp.float32),  # lane-dense (8,128) slab
        in_specs=[vmem],
        out_specs=vmem,
    )(packed)
    means = out[:K, :M]
    log_stds = out[:K, M:2 * M]
    # td.Categorical(torch.ones(K) / K) -> uniform mixture, logits = -log K.
    mix_logits = jnp.full((K,), -math.log(K), dtype=jnp.float32)
    return mix_logits, means, log_stds


# --------------------------------------------------------------------------------------
# MixtureSameFamily.log_prob over a batch of latents, as an MXU-friendly Pallas kernel.
#   (z - mu)^2 * inv_var  =  (z*z) @ inv_var^T  -  2 * z @ (mu*inv_var)^T  +  const_k
# --------------------------------------------------------------------------------------
def _make_logprob_kernel(m_dim):
    def kernel(z_ref, stats_ref, out_ref):
        z = z_ref[...]                                   # (TB, M)
        a = stats_ref[0:m_dim, :]                        # inv_var^T        (M, 128)
        bm = stats_ref[m_dim:2 * m_dim, :]               # (mu*inv_var)^T   (M, 128)
        c = stats_ref[2 * m_dim:2 * m_dim + 1, :]        # per-k constants  (1, 128)
        s1 = jnp.dot(z * z, a, preferred_element_type=jnp.float32)   # (TB, 128)
        s2 = jnp.dot(z, bm, preferred_element_type=jnp.float32)      # (TB, 128)
        comp = c + s2 - 0.5 * s1                         # log w_k + log N_k(z); padded k -> -1e30
        mx = jnp.max(comp, axis=-1, keepdims=True)
        out_ref[...] = mx + jnp.log(jnp.sum(jnp.exp(comp - mx), axis=-1, keepdims=True))

    return kernel


def mixture_log_prob(z, mix_logits, means, log_stds, *, block_b=128):
    """Pallas equivalent of td.MixtureSameFamily(...).log_prob(z); z: (B, M)."""
    B, M = z.shape
    K = means.shape[0]
    assert M % 8 == 0 and K <= _LANES

    # Tiny (K, M) precompute: packed lane-dense stats, K padded to 128 lanes.
    inv_var = jnp.exp(-2.0 * log_stds)                               # (K, M)
    a = jnp.zeros((M, _LANES), jnp.float32).at[:, :K].set(inv_var.T)
    bm = jnp.zeros((M, _LANES), jnp.float32).at[:, :K].set((means * inv_var).T)
    c_k = (mix_logits
           - 0.5 * M * jnp.log(2.0 * jnp.pi)
           - jnp.sum(log_stds, axis=-1)
           - 0.5 * jnp.sum(means * means * inv_var, axis=-1))
    c = jnp.full((8, _LANES), -1e30, jnp.float32).at[0, :K].set(c_k)  # padded comps -> ~0 weight
    stats = jnp.concatenate([a, bm, c], axis=0)                       # (2M + 8, 128)

    bp = _round_up(B, block_b)
    z_p = jnp.pad(z.astype(jnp.float32), ((0, bp - B), (0, 0)))

    out = pl.pallas_call(
        _make_logprob_kernel(M),
        grid=(bp // block_b,),
        out_shape=jax.ShapeDtypeStruct((bp, 1), jnp.float32),
        in_specs=[pl.BlockSpec((block_b, M), lambda i: (i, 0)),
                  pl.BlockSpec((2 * M + 8, _LANES), lambda i: (0, 0))],
        out_specs=pl.BlockSpec((block_b, 1), lambda i: (i, 0)),
        compiler_params=pltpu.CompilerParams(dimension_semantics=("parallel",)),
    )(z_p, stats)
    return out[:B, 0]


# --------------------------------------------------------------------------------------
# Pure-JAX references (correctness checks) and init.
# --------------------------------------------------------------------------------------
def _encoder_ref(params):
    x = params["pseudo_x"]
    h1 = jnp.maximum(x @ params["w1"] + params["b1"], 0.0)
    h2 = jnp.maximum(h1 @ params["w2"] + params["b2"], 0.0)
    out = h2 @ params["w3"] + params["b3"]
    m = params["w3"].shape[1] // 2
    return out[:, :m], out[:, m:]


def _mixture_log_prob_ref(z, mix_logits, means, log_stds):
    stds = jnp.exp(log_stds)
    zc = z[:, None, :]
    comp = -0.5 * (jnp.log(2.0 * jnp.pi) + 2.0 * log_stds + ((zc - means) / stds) ** 2)
    return jax.nn.logsumexp(comp.sum(-1) + mix_logits, axis=-1)


def init_params(key, K, D, H, M):
    """Deterministic synthetic init mirroring the torch module's shapes (weights as (in,out))."""
    ks = jax.random.split(key, 7)

    def linear(kw, kb, fan_in, fan_out):
        bound = 1.0 / math.sqrt(fan_in)  # nn.Linear default init range
        w = jax.random.uniform(kw, (fan_in, fan_out), jnp.float32, -bound, bound)
        b = jax.random.uniform(kb, (fan_out,), jnp.float32, -bound, bound)
        return w, b

    pseudo_x = jax.random.normal(ks[0], (K, D), jnp.float32)  # nn.Parameter(torch.randn(K, D))
    w1, b1 = linear(ks[1], ks[2], D, H)
    w2, b2 = linear(ks[3], ks[4], H, H)
    w3, b3 = linear(ks[5], ks[6], H, 2 * M)  # combined head; torch.chunk applied in the wrapper
    return {"pseudo_x": pseudo_x, "w1": w1, "b1": b1, "w2": w2, "b2": b2, "w3": w3, "b3": b3}


if __name__ == "__main__":
    K, D, H, M = 8, 32, 64, 16  # small shapes consistent with the module
    key = jax.random.PRNGKey(0)
    params = init_params(key, K, D, H, M)
    packed = pack_params(params)  # single (416, 128) f32 slab -> one input DMA

    forward = jax.jit(vamp_prior_forward, static_argnums=(1, 2))
    mix_logits, means, log_stds = forward(packed, K, M)
    jax.block_until_ready((mix_logits, means, log_stds))

    # Correctness vs. pure-JAX reference.
    mean_ref, log_std_ref = _encoder_ref(params)
    assert mix_logits.shape == (K,) and means.shape == (K, M) and log_stds.shape == (K, M)
    assert bool(jnp.allclose(means, mean_ref, rtol=1e-3, atol=1e-3))
    assert bool(jnp.allclose(log_stds, log_std_ref, rtol=1e-3, atol=1e-3))
    assert bool(jnp.all(jnp.isfinite(jnp.exp(log_stds))))  # component stds are positive/finite

    # Batched mixture log_prob (B deliberately not a multiple of the 128-row block).
    B = 200
    z = jax.random.normal(jax.random.PRNGKey(1), (B, M), jnp.float32)
    lp = jax.block_until_ready(jax.jit(mixture_log_prob)(z, mix_logits, means, log_stds))
    lp_ref = _mixture_log_prob_ref(z, mix_logits, means, log_stds)
    assert lp.shape == (B,) and bool(jnp.all(jnp.isfinite(lp)))
    assert bool(jnp.allclose(lp, lp_ref, rtol=1e-3, atol=1e-2))

    print("KERNEL_OK")
</pallas_src>

<mosaic_0001>
module attributes {stable_mosaic.version = 11 : i64} {
  func.func @kernel(%arg0: memref<416x128xf32, #tpu.memory_space<vmem>>, %arg1: memref<8x128xf32, #tpu.memory_space<vmem>>) attributes {dimension_semantics = [], scalar_prefetch = 0 : i64, scratch_operands = 0 : i64, tpu.core_type = #tpu.core_type<tc>} {
    %c0 = arith.constant 0 : index
    %c0_0 = arith.constant 0 : index
    %0 = vector.load %arg0[%c0, %c0_0] : memref<416x128xf32, #tpu.memory_space<vmem>>, vector<8x128xf32>
    %c8 = arith.constant 8 : index
    %c0_1 = arith.constant 0 : index
    %1 = vector.load %arg0[%c8, %c0_1] : memref<416x128xf32, #tpu.memory_space<vmem>>, vector<128x128xf32>
    %c136 = arith.constant 136 : index
    %c0_2 = arith.constant 0 : index
    %2 = vector.load %arg0[%c136, %c0_2] : memref<416x128xf32, #tpu.memory_space<vmem>>, vector<8x128xf32>
    %c144 = arith.constant 144 : index
    %c0_3 = arith.constant 0 : index
    %3 = vector.load %arg0[%c144, %c0_3] : memref<416x128xf32, #tpu.memory_space<vmem>>, vector<128x128xf32>
    %c272 = arith.constant 272 : index
    %c0_4 = arith.constant 0 : index
    %4 = vector.load %arg0[%c272, %c0_4] : memref<416x128xf32, #tpu.memory_space<vmem>>, vector<8x128xf32>
    %c280 = arith.constant 280 : index
    %c0_5 = arith.constant 0 : index
    %5 = vector.load %arg0[%c280, %c0_5] : memref<416x128xf32, #tpu.memory_space<vmem>>, vector<128x128xf32>
    %c408 = arith.constant 408 : index
    %c0_6 = arith.constant 0 : index
    %6 = vector.load %arg0[%c408, %c0_6] : memref<416x128xf32, #tpu.memory_space<vmem>>, vector<8x128xf32>
    %cst = arith.constant dense<0.000000e+00> : vector<8x128xf32>
    %7 = tpu.matmul %0, %1, %cst {dimension_numbers = #tpu.dot_dimension_numbers<[1], [0], [0], [1], [0, 0, 1, 1], [], []>} : vector<8x128xf32>, vector<128x128xf32>, vector<8x128xf32> -> vector<8x128xf32>
    %8 = arith.addf %7, %2 : vector<8x128xf32>
    %cst_7 = arith.constant 0.000000e+00 : f32
    %9 = vector.broadcast %cst_7 : f32 to vector<8x128xf32>
    %10 = arith.maximumf %8, %9 : vector<8x128xf32>
    %cst_8 = arith.constant dense<0.000000e+00> : vector<8x128xf32>
    %11 = tpu.matmul %10, %3, %cst_8 {dimension_numbers = #tpu.dot_dimension_numbers<[1], [0], [0], [1], [0, 0, 1, 1], [], []>} : vector<8x128xf32>, vector<128x128xf32>, vector<8x128xf32> -> vector<8x128xf32>
    %12 = arith.addf %11, %4 : vector<8x128xf32>
    %cst_9 = arith.constant 0.000000e+00 : f32
    %13 = vector.broadcast %cst_9 : f32 to vector<8x128xf32>
    %14 = arith.maximumf %12, %13 : vector<8x128xf32>
    %cst_10 = arith.constant dense<0.000000e+00> : vector<8x128xf32>
    %15 = tpu.matmul %14, %5, %cst_10 {dimension_numbers = #tpu.dot_dimension_numbers<[1], [0], [0], [1], [0, 0, 1, 1], [], []>} : vector<8x128xf32>, vector<128x128xf32>, vector<8x128xf32> -> vector<8x128xf32>
    %16 = arith.addf %15, %6 : vector<8x128xf32>
    %c0_11 = arith.constant 0 : index
    %c0_12 = arith.constant 0 : index
    %17 = vector.load %arg1[%c0_11, %c0_12] : memref<8x128xf32, #tpu.memory_space<vmem>>, vector<8x128xf32>
    tpu.vector_store %arg1[%c0_11, %c0_12], %16 {strides = array<i32>} : memref<8x128xf32, #tpu.memory_space<vmem>>, vector<8x128xf32>,
    return
  }
}

</mosaic_0001>

<llo_original>
// kernel: vamp_prior_forward.1
$region0: #{vamp_prior_forward.1}
  #allocation0 [shape = 'u32[]', space=smem, size = 0x4, offset = 0x4, fixed_abs, tag = 'smem constant byte address 0x4 - core index']
  #allocation1 [shape = 'u32[144,128]{1,0:T(1,128)}', space=vmem, size = 0x12000, scoped, tag = 'internal scratch']
  %s0 = inlined_call_operand.hbm [shape: f32[416,128], index: 0, kind: input, shape index: {}]
  %s1 = inlined_call_operand.vmem [shape: f32[8,128], index: 1, kind: output, shape index: {}]
  %s2 = sld [smem:[#allocation0]]
  $region18: #{vamp_prior_forward.1} parent=0
    _
  %s4 = ssub.s32 1, %s2
  %s5 = scalar_select 0, %s4, %s2
  $region1: #{vamp_prior_forward.1} parent=0
    #allocation2 [shape = 'u8[212992]{0}', space=vmem, size = 0x34000, scoped, tag = 'input window, operand 0, single buffered']
    #allocation3 [shape = 's32[1]{0}', space=sflag, size = 0x4, scoped, tag = 'scoped memory for vamp_prior_forward.1']
    %6 = vsyncpa [#allocation3], 0
    // Predicated region
    $region2: #{vamp_prior_forward.1} parent=1 // pred_check
      _
    $region3: #{vamp_prior_forward.1} parent=1 // pred_check_branch
      %8 = sbr.rel (0) target = $region5
    $region4: #{vamp_prior_forward.1} parent=1 // pred_region
      %s10 = ssub.s32 6656, 6656
      %11 = vsyncadd [#allocation3], %s10
      %s12 = sshll.u32 [#allocation2], 4
      %s13 = int_to_ptr.vmem [resolvable:$true] %s12
      %18 = dma.hbm_to_vmem [thread:$0]  %s0, 6656, %s13, [#allocation3], 128, 128, 8
    $region5: #{vamp_prior_forward.1} parent=1 // pred_fallthru
      _
    // Predicated region
    $region6: #{vamp_prior_forward.1} parent=1 // pred_check
      _
    $region7: #{vamp_prior_forward.1} parent=1 // pred_check_branch
      %20 = sbr.rel (0) target = $region9
    $region8: #{vamp_prior_forward.1} parent=1 // pred_region
      %21 = dma.done [#allocation3], 6656
    $region9: #{vamp_prior_forward.1} parent=1 // pred_fallthru
      _
    %v22 = vld [vmem:[#allocation2] sm:$0xff]
    %v23 = vld [vmem:[#allocation2 + $0x8] sm:$0xff]
    %v24 = vld [vmem:[#allocation2 + $0x10] sm:$0xff]
    %v25 = vld [vmem:[#allocation2 + $0x18] sm:$0xff]
    %v26 = vld [vmem:[#allocation2 + $0x20] sm:$0xff]
    %v27 = vld [vmem:[#allocation2 + $0x28] sm:$0xff]
    %v28 = vld [vmem:[#allocation2 + $0x30] sm:$0xff]
    %v29 = vld [vmem:[#allocation2 + $0x38] sm:$0xff]
    %v30 = vld [vmem:[#allocation2 + $0x40] sm:$0xff]
    %v31 = vld [vmem:[#allocation2 + $0x48] sm:$0xff]
    %v32 = vld [vmem:[#allocation2 + $0x50] sm:$0xff]
    %v33 = vld [vmem:[#allocation2 + $0x58] sm:$0xff]
    %v34 = vld [vmem:[#allocation2 + $0x60] sm:$0xff]
    %v35 = vld [vmem:[#allocation2 + $0x68] sm:$0xff]
    %v36 = vld [vmem:[#allocation2 + $0x70] sm:$0xff]
    %v37 = vld [vmem:[#allocation2 + $0x78] sm:$0xff]
    %v38 = vld [vmem:[#allocation2 + $0x80] sm:$0xff]
    %v39 = vld [vmem:[#allocation2 + $0x88] sm:$0xff]
    %v40 = vld [vmem:[#allocation2 + $0x90] sm:$0xff]
    %v41 = vld [vmem:[#allocation2 + $0x98] sm:$0xff]
    %v42 = vld [vmem:[#allocation2 + $0xa0] sm:$0xff]
    %v43 = vld [vmem:[#allocation2 + $0xa8] sm:$0xff]
    %v44 = vld [vmem:[#allocation2 + $0xb0] sm:$0xff]
    %v45 = vld [vmem:[#allocation2 + $0xb8] sm:$0xff]
    %v46 = vld [vmem:[#allocation2 + $0xc0] sm:$0xff]
    %v47 = vld [vmem:[#allocation2 + $0xc8] sm:$0xff]
    %v48 = vld [vmem:[#allocation2 + $0xd0] sm:$0xff]
    %v49 = vld [vmem:[#allocation2 + $0xd8] sm:$0xff]
    %v50 = vld [vmem:[#allocation2 + $0xe0] sm:$0xff]
    %v51 = vld [vmem:[#allocation2 + $0xe8] sm:$0xff]
    %v52 = vld [vmem:[#allocation2 + $0xf0] sm:$0xff]
    %v53 = vld [vmem:[#allocation2 + $0xf8] sm:$0xff]
    %v54 = vld [vmem:[#allocation2 + $0x100] sm:$0xff]
    %v55 = vld [vmem:[#allocation2 + $0x108] sm:$0xff]
    %v56 = vld [vmem:[#allocation2 + $0x110] sm:$0xff]
    %v57 = vld [vmem:[#allocation2 + $0x118] sm:$0xff]
    %v58 = vld [vmem:[#allocation2 + $0x120] sm:$0xff]
    %v59 = vld [vmem:[#allocation2 + $0x128] sm:$0xff]
    %v60 = vld [vmem:[#allocation2 + $0x130] sm:$0xff]
    %v61 = vld [vmem:[#allocation2 + $0x138] sm:$0xff]
    %v62 = vld [vmem:[#allocation2 + $0x140] sm:$0xff]
    %v63 = vld [vmem:[#allocation2 + $0x148] sm:$0xff]
    %v64 = vld [vmem:[#allocation2 + $0x150] sm:$0xff]
    %v65 = vld [vmem:[#allocation2 + $0x158] sm:$0xff]
    %v66 = vld [vmem:[#allocation2 + $0x160] sm:$0xff]
    %v67 = vld [vmem:[#allocation2 + $0x168] sm:$0xff]
    %v68 = vld [vmem:[#allocation2 + $0x170] sm:$0xff]
    %v69 = vld [vmem:[#allocation2 + $0x178] sm:$0xff]
    %v70 = vld [vmem:[#allocation2 + $0x180] sm:$0xff]
    %v71 = vld [vmem:[#allocation2 + $0x188] sm:$0xff]
    %v72 = vld [vmem:[#allocation2 + $0x190] sm:$0xff]
    %v73 = vld [vmem:[#allocation2 + $0x198] sm:$0xff]
    %74 = vmatprep.subr.mxu0 0.0
    %75 = vmatpush1.msra.mxu0 %v23
    %76 = vmatprep.subr.mxu0 0.0
    %77 = vmatpush1.msra.mxu0 %v24
    %78 = vmatprep.subr.mxu0 0.0
    %79 = vmatpush1.msra.mxu0 %v25
    %80 = vmatprep.subr.mxu0 0.0
    %81 = vmatpush1.msra.mxu0 %v26
    %82 = vmatprep.subr.mxu0 0.0
    %83 = vmatpush1.msra.mxu0 %v27
    %84 = vmatprep.subr.mxu0 0.0
    %85 = vmatpush1.msra.mxu0 %v28
    %86 = vmatprep.subr.mxu0 0.0
    %87 = vmatpush1.msra.mxu0 %v29
    %88 = vmatprep.subr.mxu0 0.0
    %89 = vmatpush1.msra.mxu0 %v30
    %90 = vmatprep.subr.mxu0 0.0
    %91 = vmatpush1.msra.mxu0 %v31
    %92 = vmatprep.subr.mxu0 0.0
    %93 = vmatpush1.msra.mxu0 %v32
    %94 = vmatprep.subr.mxu0 0.0
    %95 = vmatpush1.msra.mxu0 %v33
    %96 = vmatprep.subr.mxu0 0.0
    %97 = vmatpush1.msra.mxu0 %v34
    %98 = vmatprep.subr.mxu0 0.0
    %99 = vmatpush1.msra.mxu0 %v35
    %100 = vmatprep.subr.mxu0 0.0
    %101 = vmatpush1.msra.mxu0 %v36
    %102 = vmatprep.subr.mxu0 0.0
    %103 = vmatpush1.msra.mxu0 %v37
    %104 = vmatprep.subr.mxu0 0.0
    %105 = vmatpush1.msra.mxu0 %v38
    %106 = vmatprep.subr.mxu0 0.0
    %107 = vmatpush1.msra.mxu0 0.0
    %108 = vmatprep.subr.mxu0 0.0
    %109 = vmatpush1.msra.mxu0 0.0
    %110 = vmatprep.subr.mxu0 0.0
    %111 = vmatpush1.msra.mxu0 0.0
    %112 = vmatprep.subr.mxu0 0.0
    %113 = vmatpush1.msra.mxu0 0.0
    %114 = vmatprep.subr.mxu0 0.0
    %115 = vmatpush1.msra.mxu0 0.0
    %116 = vmatprep.subr.mxu0 0.0
    %117 = vmatpush1.msra.mxu0 0.0
    %118 = vmatprep.subr.mxu0 0.0
    %119 = vmatpush1.msra.mxu0 0.0
    %120 = vmatprep.subr.mxu0 0.0
    %121 = vmatpush1.msra.mxu0 0.0
    %122 = vmatprep.subr.mxu0 0.0
    %123 = vmatpush1.msra.mxu0 0.0
    %124 = vmatprep.subr.mxu0 0.0
    %125 = vmatpush1.msra.mxu0 0.0
    %126 = vmatprep.subr.mxu0 0.0
    %127 = vmatpush1.msra.mxu0 0.0
    %128 = vmatprep.subr.mxu0 0.0
    %129 = vmatpush1.msra.mxu0 0.0
    %130 = vmatprep.subr.mxu0 0.0
    %131 = vmatpush1.msra.mxu0 0.0
    %132 = vmatprep.subr.mxu0 0.0
    %133 = vmatpush1.msra.mxu0 0.0
    %134 = vmatprep.subr.mxu0 0.0
    %135 = vmatpush1.msra.mxu0 0.0
    %136 = vmatprep.subr.mxu0 0.0
    %137 = vmatpush1.msra.mxu0 0.0
    %138 = vmatprep.mubr.f32.mxu0 0.0
    %139 = vmatmul.mubr.f32.gmra.mrb[0].mxu0 %v22
    %v140 = vpop.f32.mrb[0].mxu0
    %v141 = vadd.f32 %v39, %v140
    %v142 = vpop.f32.mrb[0].mxu0
    %143 = vdwg.mxu0
    %v144 = vmax.f32 %v141, 0.0
    %145 = vmatprep.subr.mxu0 0.0
    %146 = vmatpush1.msra.mxu0 %v40
    %147 = vmatprep.subr.mxu0 0.0
    %148 = vmatpush1.msra.mxu0 %v41
    %149 = vmatprep.subr.mxu0 0.0
    %150 = vmatpush1.msra.mxu0 %v42
    %151 = vmatprep.subr.mxu0 0.0
    %152 = vmatpush1.msra.mxu0 %v43
    %153 = vmatprep.subr.mxu0 0.0
    %154 = vmatpush1.msra.mxu0 %v44
    %155 = vmatprep.subr.mxu0 0.0
    %156 = vmatpush1.msra.mxu0 %v45
    %157 = vmatprep.subr.mxu0 0.0
    %158 = vmatpush1.msra.mxu0 %v46
    %159 = vmatprep.subr.mxu0 0.0
    %160 = vmatpush1.msra.mxu0 %v47
    %161 = vmatprep.subr.mxu0 0.0
    %162 = vmatpush1.msra.mxu0 %v48
    %163 = vmatprep.subr.mxu0 0.0
    %164 = vmatpush1.msra.mxu0 %v49
    %165 = vmatprep.subr.mxu0 0.0
    %166 = vmatpush1.msra.mxu0 %v50
    %167 = vmatprep.subr.mxu0 0.0
    %168 = vmatpush1.msra.mxu0 %v51
    %169 = vmatprep.subr.mxu0 0.0
    %170 = vmatpush1.msra.mxu0 %v52
    %171 = vmatprep.subr.mxu0 0.0
    %172 = vmatpush1.msra.mxu0 %v53
    %173 = vmatprep.subr.mxu0 0.0
    %174 = vmatpush1.msra.mxu0 %v54
    %175 = vmatprep.subr.mxu0 0.0
    %176 = vmatpush1.msra.mxu0 %v55
    %177 = vmatprep.subr.mxu0 0.0
    %178 = vmatpush1.msra.mxu0 0.0
    %179 = vmatprep.subr.mxu0 0.0
    %180 = vmatpush1.msra.mxu0 0.0
    %181 = vmatprep.subr.mxu0 0.0
    %182 = vmatpush1.msra.mxu0 0.0
    %183 = vmatprep.subr.mxu0 0.0
    %184 = vmatpush1.msra.mxu0 0.0
    %185 = vmatprep.subr.mxu0 0.0
    %186 = vmatpush1.msra.mxu0 0.0
    %187 = vmatprep.subr.mxu0 0.0
    %188 = vmatpush1.msra.mxu0 0.0
    %189 = vmatprep.subr.mxu0 0.0
    %190 = vmatpush1.msra.mxu0 0.0
    %191 = vmatprep.subr.mxu0 0.0
    %192 = vmatpush1.msra.mxu0 0.0
    %193 = vmatprep.subr.mxu0 0.0
    %194 = vmatpush1.msra.mxu0 0.0
    %195 = vmatprep.subr.mxu0 0.0
    %196 = vmatpush1.msra.mxu0 0.0
    %197 = vmatprep.subr.mxu0 0.0
    %198 = vmatpush1.msra.mxu0 0.0
    %199 = vmatprep.subr.mxu0 0.0
    %200 = vmatpush1.msra.mxu0 0.0
    %201 = vmatprep.subr.mxu0 0.0
    %202 = vmatpush1.msra.mxu0 0.0
    %203 = vmatprep.subr.mxu0 0.0
    %204 = vmatpush1.msra.mxu0 0.0
    %205 = vmatprep.subr.mxu0 0.0
    %206 = vmatpush1.msra.mxu0 0.0
    %207 = vmatprep.subr.mxu0 0.0
    %208 = vmatpush1.msra.mxu0 0.0
    %209 = vmatprep.mubr.f32.mxu0 0.0
    %210 = vmatmul.mubr.f32.gmra.mrb[0].mxu0 %v144
    %v211 = vpop.f32.mrb[0].mxu0
    %v212 = vadd.f32 %v56, %v211
    %v213 = vpop.f32.mrb[0].mxu0
    %214 = vdwg.mxu0
    %v215 = vmax.f32 %v212, 0.0
    %216 = vmatprep.subr.mxu0 0.0
    %217 = vmatpush1.msra.mxu0 %v57
    %218 = vmatprep.subr.mxu0 0.0
    %219 = vmatpush1.msra.mxu0 %v58
    %220 = vmatprep.subr.mxu0 0.0
    %221 = vmatpush1.msra.mxu0 %v59
    %222 = vmatprep.subr.mxu0 0.0
    %223 = vmatpush1.msra.mxu0 %v60
    %224 = vmatprep.subr.mxu0 0.0
    %225 = vmatpush1.msra.mxu0 %v61
    %226 = vmatprep.subr.mxu0 0.0
    %227 = vmatpush1.msra.mxu0 %v62
    %228 = vmatprep.subr.mxu0 0.0
    %229 = vmatpush1.msra.mxu0 %v63
    %230 = vmatprep.subr.mxu0 0.0
    %231 = vmatpush1.msra.mxu0 %v64
    %232 = vmatprep.subr.mxu0 0.0
    %233 = vmatpush1.msra.mxu0 %v65
    %234 = vmatprep.subr.mxu0 0.0
    %235 = vmatpush1.msra.mxu0 %v66
    %236 = vmatprep.subr.mxu0 0.0
    %237 = vmatpush1.msra.mxu0 %v67
    %238 = vmatprep.subr.mxu0 0.0
    %239 = vmatpush1.msra.mxu0 %v68
    %240 = vmatprep.subr.mxu0 0.0
    %241 = vmatpush1.msra.mxu0 %v69
    %242 = vmatprep.subr.mxu0 0.0
    %243 = vmatpush1.msra.mxu0 %v70
    %244 = vmatprep.subr.mxu0 0.0
    %245 = vmatpush1.msra.mxu0 %v71
    %246 = vmatprep.subr.mxu0 0.0
    %247 = vmatpush1.msra.mxu0 %v72
    %248 = vmatprep.subr.mxu0 0.0
    %249 = vmatpush1.msra.mxu0 0.0
    %250 = vmatprep.subr.mxu0 0.0
    %251 = vmatpush1.msra.mxu0 0.0
    %252 = vmatprep.subr.mxu0 0.0
    %253 = vmatpush1.msra.mxu0 0.0
    %254 = vmatprep.subr.mxu0 0.0
    %255 = vmatpush1.msra.mxu0 0.0
    %256 = vmatprep.subr.mxu0 0.0
    %257 = vmatpush1.msra.mxu0 0.0
    %258 = vmatprep.subr.mxu0 0.0
    %259 = vmatpush1.msra.mxu0 0.0
    %260 = vmatprep.subr.mxu0 0.0
    %261 = vmatpush1.msra.mxu0 0.0
    %262 = vmatprep.subr.mxu0 0.0
    %263 = vmatpush1.msra.mxu0 0.0
    %264 = vmatprep.subr.mxu0 0.0
    %265 = vmatpush1.msra.mxu0 0.0
    %266 = vmatprep.subr.mxu0 0.0
    %267 = vmatpush1.msra.mxu0 0.0
    %268 = vmatprep.subr.mxu0 0.0
    %269 = vmatpush1.msra.mxu0 0.0
    %270 = vmatprep.subr.mxu0 0.0
    %271 = vmatpush1.msra.mxu0 0.0
    %272 = vmatprep.subr.mxu0 0.0
    %273 = vmatpush1.msra.mxu0 0.0
    %274 = vmatprep.subr.mxu0 0.0
    %275 = vmatpush1.msra.mxu0 0.0
    %276 = vmatprep.subr.mxu0 0.0
    %277 = vmatpush1.msra.mxu0 0.0
    %278 = vmatprep.subr.mxu0 0.0
    %279 = vmatpush1.msra.mxu0 0.0
    %280 = vmatprep.mubr.f32.mxu0 0.0
    %281 = vmatmul.mubr.f32.gmra.mrb[0].mxu0 %v215
    %v282 = vpop.f32.mrb[0].mxu0
    %v283 = vadd.f32 %v73, %v282
    %v284 = vpop.f32.mrb[0].mxu0
    %285 = vdwg.mxu0
    %286 = vst [vmem:[%s1] sm:$0xff] %v283
    // Predicated region
    $region10: #{vamp_prior_forward.1} parent=1 // pred_check
      _
    $region11: #{vamp_prior_forward.1} parent=1 // pred_check_branch
      %288 = sbr.rel (0) target = $region13
    $region12: #{vamp_prior_forward.1} parent=1 // pred_region
      _
    $region13: #{vamp_prior_forward.1} parent=1 // pred_fallthru
      _
    // Predicated region
    $region14: #{vamp_prior_forward.1} parent=1 // pred_check
      _
    $region15: #{vamp_prior_forward.1} parent=1 // pred_check_branch
      %290 = sbr.rel (0) target = $region17
    $region16: #{vamp_prior_forward.1} parent=1 // pred_region
      _
    $region17: #{vamp_prior_forward.1} parent=1 // pred_fallthru
      _
    %291 = vsyncpa [#allocation3], 1

</llo_original>
